<compile_context>
chip_gen: v7x
topology: tpu7x:2x2x1
jax: 0.10.0
libtpu: 0.0.40
codegen_flags: <defaults>
</compile_context>

<pallas_src>
import functools

import jax
import jax.numpy as jnp
from jax import lax
from jax.experimental import pallas as pl
from jax.experimental.pallas import tpu as pltpu

EPS = 1e-5


# ------------------------------------------------------------------ kernels --

def _mm_bn_relu_kernel(a_ref, b_ref, scale_ref, bias_ref, relu_ref, o_ref, acc_ref):
    """Tiled matmul with fused per-column scale*x+bias and masked ReLU epilogue."""
    k = pl.program_id(2)

    @pl.when(k == 0)
    def _():
        acc_ref[...] = jnp.zeros_like(acc_ref)

    acc_ref[...] += jnp.dot(a_ref[...], b_ref[...],
                            preferred_element_type=jnp.float32)

    @pl.when(k == pl.num_programs(2) - 1)
    def _():
        v = acc_ref[...] * scale_ref[...] + bias_ref[...]
        m = relu_ref[...]                       # 1.0 -> relu, 0.0 -> identity
        v = m * jnp.maximum(v, 0.0) + (1.0 - m) * v
        o_ref[...] = v.astype(o_ref.dtype)


def _mm_residual_kernel(a_ref, b_ref, res_ref, o_ref, acc_ref):
    """Tiled matmul with the residual add fused at the last K step only."""
    k = pl.program_id(2)

    @pl.when(k == 0)
    def _():
        acc_ref[...] = jnp.zeros_like(acc_ref)

    acc_ref[...] += jnp.dot(a_ref[...], b_ref[...],
                            preferred_element_type=jnp.float32)

    @pl.when(k == pl.num_programs(2) - 1)
    def _():
        o_ref[...] = (acc_ref[...] + res_ref[...]).astype(o_ref.dtype)


# ------------------------------------------------------------- tiling utils --

def _round_up(x, m):
    return (x + m - 1) // m * m


def _pick_tiles(M, N, K):
    # M tile: sublane-aligned; cap at 256.
    if M >= 256:
        tm = 256
    elif M >= 128:
        tm = 128
    else:
        tm = _round_up(M, 16)
    m_pad = _round_up(M, tm)

    # N / K: lane-dense multiples of 128; prefer 256-wide when the padded dim
    # allows it (feeds the 2x256^2 MXU of v6e/v7x with fewer pushes; 128 is the
    # natural width for v5e's 4x128^2 MXU).
    n_pad = _round_up(N, 128)
    tn = 256 if n_pad % 256 == 0 else 128

    k_pad = _round_up(K, 128)
    if k_pad % 512 == 0:
        tk = 512
    elif k_pad % 256 == 0:
        tk = 256
    else:
        tk = 128
    return (tm, tn, tk), (m_pad, n_pad, k_pad)


def _pad2d(x, rows, cols):
    r, c = x.shape
    if r == rows and c == cols:
        return x
    return jnp.pad(x, ((0, rows - r), (0, cols - c)))


def _compiler_params():
    # Tiles chosen above use well under the default scoped VMEM limit on every
    # generation (v7x: 32 of 64 MiB), but raise the cap explicitly so larger
    # tiles remain legal if shapes grow.
    return pltpu.CompilerParams(
        dimension_semantics=("parallel", "parallel", "arbitrary"),
        vmem_limit_bytes=32 * 1024 * 1024,
    )


# ------------------------------------------------------------- pallas calls --

def pallas_matmul_bn_relu(a, b, scale, bias, relu_mask):
    """(A @ B) with a fused per-column scale*x+bias + masked-ReLU epilogue.

    a: (M, K), b: (K, N)  -> cast to bf16 operands, f32 accumulation.
    scale / bias / relu_mask: (N,) f32.  Returns (M, N) f32.
    """
    M, K = a.shape
    K2, N = b.shape
    assert K == K2
    (tm, tn, tk), (mp, npad, kp) = _pick_tiles(M, N, K)

    a_p = _pad2d(a.astype(jnp.bfloat16), mp, kp)
    b_p = _pad2d(b.astype(jnp.bfloat16), kp, npad)
    s_p = _pad2d(scale.reshape(1, N).astype(jnp.float32), 1, npad)
    bi_p = _pad2d(bias.reshape(1, N).astype(jnp.float32), 1, npad)
    r_p = _pad2d(relu_mask.reshape(1, N).astype(jnp.float32), 1, npad)

    grid = (mp // tm, npad // tn, kp // tk)
    cost = pl.CostEstimate(
        flops=2 * mp * npad * kp,
        transcendentals=0,
        bytes_accessed=(mp * kp + kp * npad) * 2 + mp * npad * 4,
    )
    out = pl.pallas_call(
        _mm_bn_relu_kernel,
        out_shape=jax.ShapeDtypeStruct((mp, npad), jnp.float32),
        grid_spec=pltpu.PrefetchScalarGridSpec(
            num_scalar_prefetch=0,
            grid=grid,
            in_specs=[
                pl.BlockSpec((tm, tk), lambda i, j, k: (i, k)),
                pl.BlockSpec((tk, tn), lambda i, j, k: (k, j)),
                pl.BlockSpec((1, tn), lambda i, j, k: (0, j)),
                pl.BlockSpec((1, tn), lambda i, j, k: (0, j)),
                pl.BlockSpec((1, tn), lambda i, j, k: (0, j)),
            ],
            out_specs=pl.BlockSpec((tm, tn), lambda i, j, k: (i, j)),
            scratch_shapes=[pltpu.VMEM((tm, tn), jnp.float32)],
        ),
        compiler_params=_compiler_params(),
        cost_estimate=cost,
    )(a_p, b_p, s_p, bi_p, r_p)
    return out[:M, :N]


def pallas_matmul_residual(a, b, res):
    """(A @ B) + res, residual fused at the last K step.  Returns (M, N) f32."""
    M, K = a.shape
    K2, N = b.shape
    assert K == K2 and res.shape == (M, N)
    (tm, tn, tk), (mp, npad, kp) = _pick_tiles(M, N, K)

    a_p = _pad2d(a.astype(jnp.bfloat16), mp, kp)
    b_p = _pad2d(b.astype(jnp.bfloat16), kp, npad)
    r_p = _pad2d(res.astype(jnp.float32), mp, npad)

    grid = (mp // tm, npad // tn, kp // tk)
    cost = pl.CostEstimate(
        flops=2 * mp * npad * kp,
        transcendentals=0,
        bytes_accessed=(mp * kp + kp * npad) * 2 + 2 * mp * npad * 4,
    )
    out = pl.pallas_call(
        _mm_residual_kernel,
        out_shape=jax.ShapeDtypeStruct((mp, npad), jnp.float32),
        grid_spec=pltpu.PrefetchScalarGridSpec(
            num_scalar_prefetch=0,
            grid=grid,
            in_specs=[
                pl.BlockSpec((tm, tk), lambda i, j, k: (i, k)),
                pl.BlockSpec((tk, tn), lambda i, j, k: (k, j)),
                pl.BlockSpec((tm, tn), lambda i, j, k: (i, j)),
            ],
            out_specs=pl.BlockSpec((tm, tn), lambda i, j, k: (i, j)),
            scratch_shapes=[pltpu.VMEM((tm, tn), jnp.float32)],
        ),
        compiler_params=_compiler_params(),
        cost_estimate=cost,
    )(a_p, b_p, r_p)
    return out[:M, :N]


# ------------------------------------------------------------------- glue ----

def _im2col(x_nhwc, kh, kw, stride, pad):
    """x: (N, H, W, C) -> patches (N*OH*OW, KH*KW*C), plus (OH, OW)."""
    xp = jnp.pad(x_nhwc, ((0, 0), (pad, pad), (pad, pad), (0, 0)))
    n, hp, wp, c = xp.shape
    oh = (hp - kh) // stride + 1
    ow = (wp - kw) // stride + 1
    slabs = []
    for i in range(kh):
        for j in range(kw):
            slabs.append(
                xp[:, i: i + stride * oh: stride, j: j + stride * ow: stride, :])
    cols = jnp.stack(slabs, axis=3)                  # (N, OH, OW, KH*KW, C)
    return cols.reshape(n * oh * ow, kh * kw * c), oh, ow


def _conv_weight_to_mat(w_oihw):
    """PyTorch (Cout, Cin, KH, KW) -> im2col matrix (KH*KW*Cin, Cout)."""
    co, ci, kh, kw = w_oihw.shape
    return jnp.transpose(w_oihw, (2, 3, 1, 0)).reshape(kh * kw * ci, co)


def _fold_bn(gamma, beta, mean, var):
    scale = gamma / jnp.sqrt(var + EPS)
    bias = beta - mean * scale
    return scale, bias


def basic_block_forward(x_nchw, params, stride, equal_in_out):
    """Pallas implementation of BasicBlock.forward (inference BN, droprate=0)."""
    if equal_in_out and stride != 1:
        # The PyTorch module cannot add an identity shortcut across a stride.
        raise ValueError("equal_in_out BasicBlock requires stride == 1")

    n, cin, h, w = x_nchw.shape
    x = jnp.transpose(x_nchw, (0, 2, 3, 1)).astype(jnp.float32)       # NHWC

    # ---- BN1 + ReLU1 (tiny per-channel elementwise; left to XLA, C < 128) ----
    s1, b1 = _fold_bn(*params["bn1"])
    x_act = jnp.maximum(x * s1 + b1, 0.0)

    cout = params["conv1"].shape[0]

    # ---- conv1 (3x3, stride, pad=1) with BN2+ReLU2 epilogue,
    #      plus fused 1x1 convShortcut columns when planes differ -------------
    cols1, oh, ow = _im2col(x_act.astype(jnp.bfloat16), 3, 3, stride, 1)
    w1_mat = _conv_weight_to_mat(params["conv1"])                     # (9*Cin, Cout)
    s2, b2 = _fold_bn(*params["bn2"])

    if equal_in_out:
        b_mat = w1_mat
        scale = s2
        bias = b2
        relu = jnp.ones((cout,), jnp.float32)
    else:
        # convShortcut(relu1(bn1(x))) is exactly the centre-tap (t=4) column
        # block of cols1 times the 1x1 weight, so it shares the conv1 matmul.
        wsc = _conv_weight_to_mat(params["conv_sc"])                  # (Cin, Cout)
        wsc_full = jnp.zeros((9 * cin, cout), jnp.float32)
        wsc_full = wsc_full.at[4 * cin:5 * cin, :].set(wsc)
        b_mat = jnp.concatenate([w1_mat, wsc_full], axis=1)           # (9*Cin, 2*Cout)
        scale = jnp.concatenate([s2, jnp.ones((cout,), jnp.float32)])
        bias = jnp.concatenate([b2, jnp.zeros((cout,), jnp.float32)])
        relu = jnp.concatenate([jnp.ones((cout,), jnp.float32),
                                jnp.zeros((cout,), jnp.float32)])

    fused = pallas_matmul_bn_relu(cols1, b_mat, scale, bias, relu)    # (M, Ncols)

    if equal_in_out:
        act2 = fused                                                  # relu2(bn2(conv1))
        shortcut = x.reshape(n * h * w, cin)                          # identity on x
    else:
        act2 = fused[:, :cout]
        shortcut = fused[:, cout:]

    # droprate == 0.0 -> dropout is identity.

    # ---- conv2 (3x3, stride 1, pad 1) + residual add (fused, last-K gated) ----
    cols2, _, _ = _im2col(act2.reshape(n, oh, ow, cout).astype(jnp.bfloat16),
                          3, 3, 1, 1)
    w2_mat = _conv_weight_to_mat(params["conv2"])                     # (9*Cout, Cout)
    y = pallas_matmul_residual(cols2, w2_mat, shortcut)               # (M, Cout)

    return jnp.transpose(y.reshape(n, oh, ow, cout), (0, 3, 1, 2))    # NCHW


# --------------------------------------------------------------- reference ---

def _ref_forward(x_nchw, params, stride, equal_in_out):
    def bn(x, g, b, m, v):
        return (g[None, :, None, None] * (x - m[None, :, None, None])
                / jnp.sqrt(v[None, :, None, None] + EPS)
                + b[None, :, None, None])

    dn = ("NCHW", "OIHW", "NCHW")
    x_act = jax.nn.relu(bn(x_nchw, *params["bn1"]))
    out = lax.conv_general_dilated(
        x_act, params["conv1"], (stride, stride), ((1, 1), (1, 1)),
        dimension_numbers=dn)
    out = jax.nn.relu(bn(out, *params["bn2"]))
    out = lax.conv_general_dilated(
        out, params["conv2"], (1, 1), ((1, 1), (1, 1)), dimension_numbers=dn)
    if equal_in_out:
        sc = x_nchw
    else:
        sc = lax.conv_general_dilated(
            x_act, params["conv_sc"], (stride, stride), ((0, 0), (0, 0)),
            dimension_numbers=dn)
    return sc + out


# -------------------------------------------------------------------- main ---

def _make_params(key, in_planes, out_planes, equal_in_out):
    ks = jax.random.split(key, 12)
    return {
        "bn1": (
            jax.random.normal(ks[0], (in_planes,), jnp.float32) * 0.1 + 1.0,   # gamma
            jax.random.normal(ks[1], (in_planes,), jnp.float32) * 0.1,         # beta
            jax.random.normal(ks[2], (in_planes,), jnp.float32) * 0.1,         # running_mean
            jnp.abs(jax.random.normal(ks[3], (in_planes,), jnp.float32)) * 0.1 + 1.0,  # running_var
        ),
        "conv1": jax.random.normal(ks[4], (out_planes, in_planes, 3, 3), jnp.float32) * 0.1,
        "bn2": (
            jax.random.normal(ks[5], (out_planes,), jnp.float32) * 0.1 + 1.0,
            jax.random.normal(ks[6], (out_planes,), jnp.float32) * 0.1,
            jax.random.normal(ks[7], (out_planes,), jnp.float32) * 0.1,
            jnp.abs(jax.random.normal(ks[8], (out_planes,), jnp.float32)) * 0.1 + 1.0,
        ),
        "conv2": jax.random.normal(ks[9], (out_planes, out_planes, 3, 3), jnp.float32) * 0.1,
        "conv_sc": (None if equal_in_out else
                    jax.random.normal(ks[10], (out_planes, in_planes, 1, 1),
                                      jnp.float32) * 0.1),
    }


if __name__ == "__main__":
    key = jax.random.PRNGKey(0)

    # Two small configs: (a) in!=out with stride 2 (exercises the fused 1x1
    # shortcut), (b) in==out with stride 1 (identity shortcut).
    configs = [
        dict(in_planes=4, out_planes=8, stride=2, N=2, H=16, W=16),
        dict(in_planes=8, out_planes=8, stride=1, N=2, H=16, W=16),
    ]

    ok = True
    for idx, cfg in enumerate(configs):
        equal_in_out = cfg["in_planes"] == cfg["out_planes"]
        pkey = jax.random.fold_in(key, idx)
        params = _make_params(pkey, cfg["in_planes"], cfg["out_planes"], equal_in_out)
        x = jax.random.normal(jax.random.fold_in(pkey, 123),
                              (cfg["N"], cfg["in_planes"], cfg["H"], cfg["W"]),
                              jnp.float32)

        fwd = jax.jit(functools.partial(
            basic_block_forward, stride=cfg["stride"], equal_in_out=equal_in_out))
        y = jax.block_until_ready(fwd(x, params))

        y_ref = _ref_forward(x, params, cfg["stride"], equal_in_out)
        assert y.shape == y_ref.shape, (y.shape, y_ref.shape)
        # bf16 matmul operands (f32 accumulation) vs an all-f32 reference:
        # expected elementwise error is O(1e-2); structural bugs would be O(1).
        ok &= bool(jnp.allclose(y, y_ref, atol=1e-1, rtol=1e-1))

    assert ok, "mismatch vs reference"
    print("KERNEL_OK")
</pallas_src>

<mosaic_0001>
module attributes {stable_mosaic.version = 11 : i64} {
  func.func @_mm_bn_relu_kernel(%arg0: i32, %arg1: i32, %arg2: i32, %arg3: memref<128x128xbf16, #tpu.memory_space<vmem>>, %arg4: memref<128x128xbf16, #tpu.memory_space<vmem>>, %arg5: memref<1x128xf32, #tpu.memory_space<vmem>>, %arg6: memref<1x128xf32, #tpu.memory_space<vmem>>, %arg7: memref<1x128xf32, #tpu.memory_space<vmem>>, %arg8: memref<128x128xf32, #tpu.memory_space<vmem>>, %arg9: memref<128x128xf32, #tpu.memory_space<vmem>>) attributes {dimension_semantics = [#tpu.dimension_semantics<parallel>, #tpu.dimension_semantics<parallel>, #tpu.dimension_semantics<arbitrary>], iteration_bounds = array<i64: 1, 1, 1>, scalar_prefetch = 0 : i64, scratch_operands = 1 : i64, tpu.core_type = #tpu.core_type<tc>, window_params = [{transform_indices = @transform_0, window_bounds = array<i64: 128, 128>}, {transform_indices = @transform_1, window_bounds = array<i64: 128, 128>}, {transform_indices = @transform_2, window_bounds = array<i64: 1, 128>}, {transform_indices = @transform_3, window_bounds = array<i64: 1, 128>}, {transform_indices = @transform_4, window_bounds = array<i64: 1, 128>}, {transform_indices = @transform_5, window_bounds = array<i64: 128, 128>}]} {
    %c0_i32 = arith.constant 0 : i32
    %0 = arith.cmpi eq, %arg2, %c0_i32 : i32
    %1 = arith.extui %0 : i1 to i32
    %c0_i32_0 = arith.constant 0 : i32
    %2 = arith.cmpi ne, %1, %c0_i32_0 : i32
    scf.if %2 {
      %cst_10 = arith.constant 0.000000e+00 : f32
      %12 = vector.broadcast %cst_10 : f32 to vector<128x128xf32>
      %c0_11 = arith.constant 0 : index
      %c0_12 = arith.constant 0 : index
      %13 = vector.load %arg9[%c0_11, %c0_12] : memref<128x128xf32, #tpu.memory_space<vmem>>, vector<128x128xf32>
      tpu.vector_store %arg9[%c0_11, %c0_12], %12 {strides = array<i32>} : memref<128x128xf32, #tpu.memory_space<vmem>>, vector<128x128xf32>,
    } else {
    }
    %c0 = arith.constant 0 : index
    %c0_1 = arith.constant 0 : index
    %3 = vector.load %arg9[%c0, %c0_1] : memref<128x128xf32, #tpu.memory_space<vmem>>, vector<128x128xf32>
    %c0_2 = arith.constant 0 : index
    %c0_3 = arith.constant 0 : index
    %4 = vector.load %arg3[%c0_2, %c0_3] : memref<128x128xbf16, #tpu.memory_space<vmem>>, vector<128x128xbf16>
    %c0_4 = arith.constant 0 : index
    %c0_5 = arith.constant 0 : index
    %5 = vector.load %arg4[%c0_4, %c0_5] : memref<128x128xbf16, #tpu.memory_space<vmem>>, vector<128x128xbf16>
    %cst = arith.constant dense<0.000000e+00> : vector<128x128xf32>
    %6 = tpu.matmul %4, %5, %cst {dimension_numbers = #tpu.dot_dimension_numbers<[1], [0], [0], [1], [0, 0, 1, 1], [], []>} : vector<128x128xbf16>, vector<128x128xbf16>, vector<128x128xf32> -> vector<128x128xf32>
    %7 = arith.addf %3, %6 : vector<128x128xf32>
    %c0_6 = arith.constant 0 : index
    %c0_7 = arith.constant 0 : index
    %8 = vector.load %arg9[%c0_6, %c0_7] : memref<128x128xf32, #tpu.memory_space<vmem>>, vector<128x128xf32>
    tpu.vector_store %arg9[%c0_6, %c0_7], %7 {strides = array<i32>} : memref<128x128xf32, #tpu.memory_space<vmem>>, vector<128x128xf32>,
    %c0_i32_8 = arith.constant 0 : i32
    %9 = arith.cmpi eq, %arg2, %c0_i32_8 : i32
    %10 = arith.extui %9 : i1 to i32
    %c0_i32_9 = arith.constant 0 : i32
    %11 = arith.cmpi ne, %10, %c0_i32_9 : i32
    scf.if %11 {
      %c0_10 = arith.constant 0 : index
      %c0_11 = arith.constant 0 : index
      %12 = vector.load %arg9[%c0_10, %c0_11] : memref<128x128xf32, #tpu.memory_space<vmem>>, vector<128x128xf32>
      %c0_12 = arith.constant 0 : index
      %c0_13 = arith.constant 0 : index
      %13 = vector.load %arg5[%c0_12, %c0_13] : memref<1x128xf32, #tpu.memory_space<vmem>>, vector<1x128xf32>
      %14 = vector.broadcast %13 : vector<1x128xf32> to vector<128x128xf32>
      %15 = arith.mulf %12, %14 : vector<128x128xf32>
      %c0_14 = arith.constant 0 : index
      %c0_15 = arith.constant 0 : index
      %16 = vector.load %arg6[%c0_14, %c0_15] : memref<1x128xf32, #tpu.memory_space<vmem>>, vector<1x128xf32>
      %17 = vector.broadcast %16 : vector<1x128xf32> to vector<128x128xf32>
      %18 = arith.addf %15, %17 : vector<128x128xf32>
      %c0_16 = arith.constant 0 : index
      %c0_17 = arith.constant 0 : index
      %19 = vector.load %arg7[%c0_16, %c0_17] : memref<1x128xf32, #tpu.memory_space<vmem>>, vector<1x128xf32>
      %cst_18 = arith.constant 0.000000e+00 : f32
      %20 = vector.broadcast %cst_18 : f32 to vector<128x128xf32>
      %21 = arith.maximumf %18, %20 : vector<128x128xf32>
      %22 = vector.broadcast %19 : vector<1x128xf32> to vector<128x128xf32>
      %23 = arith.mulf %22, %21 : vector<128x128xf32>
      %cst_19 = arith.constant 1.000000e+00 : f32
      %24 = vector.broadcast %cst_19 : f32 to vector<1x128xf32>
      %25 = arith.subf %24, %19 : vector<1x128xf32>
      %26 = vector.broadcast %25 : vector<1x128xf32> to vector<128x128xf32>
      %27 = arith.mulf %26, %18 : vector<128x128xf32>
      %28 = arith.addf %23, %27 : vector<128x128xf32>
      %c0_20 = arith.constant 0 : index
      %c0_21 = arith.constant 0 : index
      %29 = vector.load %arg8[%c0_20, %c0_21] : memref<128x128xf32, #tpu.memory_space<vmem>>, vector<128x128xf32>
      tpu.vector_store %arg8[%c0_20, %c0_21], %28 {strides = array<i32>} : memref<128x128xf32, #tpu.memory_space<vmem>>, vector<128x128xf32>,
    } else {
    }
    return
  }
  func.func @transform_0(%arg0: i32, %arg1: i32, %arg2: i32) -> (i32, i32) {
    %c0_i32 = arith.constant 0 : i32
    return %arg0, %arg2 : i32, i32
  }
  func.func @transform_1(%arg0: i32, %arg1: i32, %arg2: i32) -> (i32, i32) {
    %c0_i32 = arith.constant 0 : i32
    return %arg2, %arg1 : i32, i32
  }
  func.func @transform_2(%arg0: i32, %arg1: i32, %arg2: i32) -> (i32, i32) {
    %c0_i32 = arith.constant 0 : i32
    %c0_i32_0 = arith.constant 0 : i32
    return %c0_i32, %arg1 : i32, i32
  }
  func.func @transform_3(%arg0: i32, %arg1: i32, %arg2: i32) -> (i32, i32) {
    %c0_i32 = arith.constant 0 : i32
    %c0_i32_0 = arith.constant 0 : i32
    return %c0_i32, %arg1 : i32, i32
  }
  func.func @transform_4(%arg0: i32, %arg1: i32, %arg2: i32) -> (i32, i32) {
    %c0_i32 = arith.constant 0 : i32
    %c0_i32_0 = arith.constant 0 : i32
    return %c0_i32, %arg1 : i32, i32
  }
  func.func @transform_5(%arg0: i32, %arg1: i32, %arg2: i32) -> (i32, i32) {
    %c0_i32 = arith.constant 0 : i32
    return %arg0, %arg1 : i32, i32
  }
}

module attributes {stable_mosaic.version = 11 : i64} {
  func.func @_mm_residual_kernel(%arg0: i32, %arg1: i32, %arg2: i32, %arg3: memref<128x128xbf16, #tpu.memory_space<vmem>>, %arg4: memref<128x128xbf16, #tpu.memory_space<vmem>>, %arg5: memref<128x128xf32, #tpu.memory_space<vmem>>, %arg6: memref<128x128xf32, #tpu.memory_space<vmem>>, %arg7: memref<128x128xf32, #tpu.memory_space<vmem>>) attributes {dimension_semantics = [#tpu.dimension_semantics<parallel>, #tpu.dimension_semantics<parallel>, #tpu.dimension_semantics<arbitrary>], iteration_bounds = array<i64: 1, 1, 1>, scalar_prefetch = 0 : i64, scratch_operands = 1 : i64, tpu.core_type = #tpu.core_type<tc>, window_params = [{transform_indices = @transform_0, window_bounds = array<i64: 128, 128>}, {transform_indices = @transform_1, window_bounds = array<i64: 128, 128>}, {transform_indices = @transform_2, window_bounds = array<i64: 128, 128>}, {transform_indices = @transform_3, window_bounds = array<i64: 128, 128>}]} {
    %c0_i32 = arith.constant 0 : i32
    %0 = arith.cmpi eq, %arg2, %c0_i32 : i32
    %1 = arith.extui %0 : i1 to i32
    %c0_i32_0 = arith.constant 0 : i32
    %2 = arith.cmpi ne, %1, %c0_i32_0 : i32
    scf.if %2 {
      %cst_10 = arith.constant 0.000000e+00 : f32
      %12 = vector.broadcast %cst_10 : f32 to vector<128x128xf32>
      %c0_11 = arith.constant 0 : index
      %c0_12 = arith.constant 0 : index
      %13 = vector.load %arg7[%c0_11, %c0_12] : memref<128x128xf32, #tpu.memory_space<vmem>>, vector<128x128xf32>
      tpu.vector_store %arg7[%c0_11, %c0_12], %12 {strides = array<i32>} : memref<128x128xf32, #tpu.memory_space<vmem>>, vector<128x128xf32>,
    } else {
    }
    %c0 = arith.constant 0 : index
    %c0_1 = arith.constant 0 : index
    %3 = vector.load %arg7[%c0, %c0_1] : memref<128x128xf32, #tpu.memory_space<vmem>>, vector<128x128xf32>
    %c0_2 = arith.constant 0 : index
    %c0_3 = arith.constant 0 : index
    %4 = vector.load %arg3[%c0_2, %c0_3] : memref<128x128xbf16, #tpu.memory_space<vmem>>, vector<128x128xbf16>
    %c0_4 = arith.constant 0 : index
    %c0_5 = arith.constant 0 : index
    %5 = vector.load %arg4[%c0_4, %c0_5] : memref<128x128xbf16, #tpu.memory_space<vmem>>, vector<128x128xbf16>
    %cst = arith.constant dense<0.000000e+00> : vector<128x128xf32>
    %6 = tpu.matmul %4, %5, %cst {dimension_numbers = #tpu.dot_dimension_numbers<[1], [0], [0], [1], [0, 0, 1, 1], [], []>} : vector<128x128xbf16>, vector<128x128xbf16>, vector<128x128xf32> -> vector<128x128xf32>
    %7 = arith.addf %3, %6 : vector<128x128xf32>
    %c0_6 = arith.constant 0 : index
    %c0_7 = arith.constant 0 : index
    %8 = vector.load %arg7[%c0_6, %c0_7] : memref<128x128xf32, #tpu.memory_space<vmem>>, vector<128x128xf32>
    tpu.vector_store %arg7[%c0_6, %c0_7], %7 {strides = array<i32>} : memref<128x128xf32, #tpu.memory_space<vmem>>, vector<128x128xf32>,
    %c0_i32_8 = arith.constant 0 : i32
    %9 = arith.cmpi eq, %arg2, %c0_i32_8 : i32
    %10 = arith.extui %9 : i1 to i32
    %c0_i32_9 = arith.constant 0 : i32
    %11 = arith.cmpi ne, %10, %c0_i32_9 : i32
    scf.if %11 {
      %c0_10 = arith.constant 0 : index
      %c0_11 = arith.constant 0 : index
      %12 = vector.load %arg7[%c0_10, %c0_11] : memref<128x128xf32, #tpu.memory_space<vmem>>, vector<128x128xf32>
      %c0_12 = arith.constant 0 : index
      %c0_13 = arith.constant 0 : index
      %13 = vector.load %arg5[%c0_12, %c0_13] : memref<128x128xf32, #tpu.memory_space<vmem>>, vector<128x128xf32>
      %14 = arith.addf %12, %13 : vector<128x128xf32>
      %c0_14 = arith.constant 0 : index
      %c0_15 = arith.constant 0 : index
      %15 = vector.load %arg6[%c0_14, %c0_15] : memref<128x128xf32, #tpu.memory_space<vmem>>, vector<128x128xf32>
      tpu.vector_store %arg6[%c0_14, %c0_15], %14 {strides = array<i32>} : memref<128x128xf32, #tpu.memory_space<vmem>>, vector<128x128xf32>,
    } else {
    }
    return
  }
  func.func @transform_0(%arg0: i32, %arg1: i32, %arg2: i32) -> (i32, i32) {
    %c0_i32 = arith.constant 0 : i32
    return %arg0, %arg2 : i32, i32
  }
  func.func @transform_1(%arg0: i32, %arg1: i32, %arg2: i32) -> (i32, i32) {
    %c0_i32 = arith.constant 0 : i32
    return %arg2, %arg1 : i32, i32
  }
  func.func @transform_2(%arg0: i32, %arg1: i32, %arg2: i32) -> (i32, i32) {
    %c0_i32 = arith.constant 0 : i32
    return %arg0, %arg1 : i32, i32
  }
  func.func @transform_3(%arg0: i32, %arg1: i32, %arg2: i32) -> (i32, i32) {
    %c0_i32 = arith.constant 0 : i32
    return %arg0, %arg1 : i32, i32
  }
}

</mosaic_0001>

<llo_original>
// kernel: basic_block_forward.2
$region0: #{basic_block_forward.2}
  #allocation0 [shape = 'u32[]', space=smem, size = 0x4, offset = 0x4, fixed_abs, tag = 'smem constant byte address 0x4 - core index']
  #allocation1 [shape = 'u32[144,128]{1,0:T(1,128)}', space=vmem, size = 0x12000, scoped, tag = 'internal scratch']
  #allocation2 [shape = 'f32[128,128]{1,0:T(8,128)}', space=vmem, size = 0x10000, scoped, tag = 'scratch operand']
  %s0 = inlined_call_operand.vmem [shape: bf16[128,128], index: 0, kind: input, shape index: {}]
  %s1 = inlined_call_operand.vmem [shape: bf16[128,128], index: 1, kind: input, shape index: {}]
  %s2 = inlined_call_operand.vmem [shape: f32[1,128], index: 2, kind: input, shape index: {}]
  %s3 = inlined_call_operand.vmem [shape: f32[1,128], index: 3, kind: input, shape index: {}]
  %s4 = inlined_call_operand.vmem [shape: f32[1,128], index: 4, kind: input, shape index: {}]
  %s5 = inlined_call_operand.vmem [shape: f32[128,128], index: 5, kind: output, shape index: {}]
  %s6 = sld [smem:[#allocation0]]
  $region38: #{basic_block_forward.2} parent=0
    _
  %s8 = ssub.s32 1, %s6
  %s9 = scalar_select 0, %s8, %s6
  // Predicated region
  $region2: #{basic_block_forward.2} parent=0 // pred_check
    _
  $region3: #{basic_block_forward.2} parent=0 // pred_check_branch
    %11 = sbr.rel (0) target = $region5
  $region4: #{basic_block_forward.2} parent=0 // pred_region
    _
  $region5: #{basic_block_forward.2} parent=0 // pred_fallthru
    _
  // Predicated region
  $region6: #{basic_block_forward.2} parent=0 // pred_check
    _
  $region7: #{basic_block_forward.2} parent=0 // pred_check_branch
    %13 = sbr.rel (0) target = $region9
  $region8: #{basic_block_forward.2} parent=0 // pred_region
    _
  $region9: #{basic_block_forward.2} parent=0 // pred_fallthru
    _
  // Predicated region
  $region10: #{basic_block_forward.2} parent=0 // pred_check
    _
  $region11: #{basic_block_forward.2} parent=0 // pred_check_branch
    %15 = sbr.rel (0) target = $region13
  $region12: #{basic_block_forward.2} parent=0 // pred_region
    _
  $region13: #{basic_block_forward.2} parent=0 // pred_fallthru
    _
  // Predicated region
  $region14: #{basic_block_forward.2} parent=0 // pred_check
    _
  $region15: #{basic_block_forward.2} parent=0 // pred_check_branch
    %17 = sbr.rel (0) target = $region17
  $region16: #{basic_block_forward.2} parent=0 // pred_region
    _
  $region17: #{basic_block_forward.2} parent=0 // pred_fallthru
    _
  // Predicated region
  $region18: #{basic_block_forward.2} parent=0 // pred_check
    _
  $region19: #{basic_block_forward.2} parent=0 // pred_check_branch
    %19 = sbr.rel (0) target = $region21
  $region20: #{basic_block_forward.2} parent=0 // pred_region
    _
  $region21: #{basic_block_forward.2} parent=0 // pred_fallthru
    _
  %p21 = scmp.eq.s32.totalorder 0, 0
  // Predicated region
  $region22: #{basic_block_forward.2} parent=0 // pred_check
    %p22 = pneg %p21
  $region23: #{basic_block_forward.2} parent=0 // pred_check_branch
    %24 = sbr.rel (%p22) target = $region25
  $region24: #{basic_block_forward.2} parent=0 // pred_region
    %25 = vst [vmem:[#allocation2] sm:$0xff] 0.0
    %26 = vst [vmem:[#allocation2 + $0x8] sm:$0xff] 0.0
    %27 = vst [vmem:[#allocation2 + $0x10] sm:$0xff] 0.0
    %28 = vst [vmem:[#allocation2 + $0x18] sm:$0xff] 0.0
    %29 = vst [vmem:[#allocation2 + $0x20] sm:$0xff] 0.0
    %30 = vst [vmem:[#allocation2 + $0x28] sm:$0xff] 0.0
    %31 = vst [vmem:[#allocation2 + $0x30] sm:$0xff] 0.0
    %32 = vst [vmem:[#allocation2 + $0x38] sm:$0xff] 0.0
    %33 = vst [vmem:[#allocation2 + $0x40] sm:$0xff] 0.0
    %34 = vst [vmem:[#allocation2 + $0x48] sm:$0xff] 0.0
    %35 = vst [vmem:[#allocation2 + $0x50] sm:$0xff] 0.0
    %36 = vst [vmem:[#allocation2 + $0x58] sm:$0xff] 0.0
    %37 = vst [vmem:[#allocation2 + $0x60] sm:$0xff] 0.0
    %38 = vst [vmem:[#allocation2 + $0x68] sm:$0xff] 0.0
    %39 = vst [vmem:[#allocation2 + $0x70] sm:$0xff] 0.0
    %40 = vst [vmem:[#allocation2 + $0x78] sm:$0xff] 0.0
  $region25: #{basic_block_forward.2} parent=0 // pred_fallthru
    _
  %v41 = vld [vmem:[#allocation2] sm:$0xff]
  %v42 = vld [vmem:[#allocation2 + $0x8] sm:$0xff]
  %v43 = vld [vmem:[#allocation2 + $0x10] sm:$0xff]
  %v44 = vld [vmem:[#allocation2 + $0x18] sm:$0xff]
  %v45 = vld [vmem:[#allocation2 + $0x20] sm:$0xff]
  %v46 = vld [vmem:[#allocation2 + $0x28] sm:$0xff]
  %v47 = vld [vmem:[#allocation2 + $0x30] sm:$0xff]
  %v48 = vld [vmem:[#allocation2 + $0x38] sm:$0xff]
  %v49 = vld [vmem:[#allocation2 + $0x40] sm:$0xff]
  %v50 = vld [vmem:[#allocation2 + $0x48] sm:$0xff]
  %v51 = vld [vmem:[#allocation2 + $0x50] sm:$0xff]
  %v52 = vld [vmem:[#allocation2 + $0x58] sm:$0xff]
  %v53 = vld [vmem:[#allocation2 + $0x60] sm:$0xff]
  %v54 = vld [vmem:[#allocation2 + $0x68] sm:$0xff]
  %v55 = vld [vmem:[#allocation2 + $0x70] sm:$0xff]
  %v56 = vld [vmem:[#allocation2 + $0x78] sm:$0xff]
  %v57 = vld [vmem:[%s0] sm:$0xf]
  %v58 = vld [vmem:[%s0 + $0x4] sm:$0xf]
  %v59 = vld [vmem:[%s0 + $0x8] sm:$0xf]
  %v60 = vld [vmem:[%s0 + $0xc] sm:$0xf]
  %v61 = vld [vmem:[%s0 + $0x10] sm:$0xf]
  %v62 = vld [vmem:[%s0 + $0x14] sm:$0xf]
  %v63 = vld [vmem:[%s0 + $0x18] sm:$0xf]
  %v64 = vld [vmem:[%s0 + $0x1c] sm:$0xf]
  %v65 = vld [vmem:[%s0 + $0x20] sm:$0xf]
  %v66 = vld [vmem:[%s0 + $0x24] sm:$0xf]
  %v67 = vld [vmem:[%s0 + $0x28] sm:$0xf]
  %v68 = vld [vmem:[%s0 + $0x2c] sm:$0xf]
  %v69 = vld [vmem:[%s0 + $0x30] sm:$0xf]
  %v70 = vld [vmem:[%s0 + $0x34] sm:$0xf]
  %v71 = vld [vmem:[%s0 + $0x38] sm:$0xf]
  %v72 = vld [vmem:[%s0 + $0x3c] sm:$0xf]
  %v73 = vld [vmem:[%s1] sm:$0xf]
  %v74 = vld [vmem:[%s1 + $0x4] sm:$0xf]
  %v75 = vld [vmem:[%s1 + $0x8] sm:$0xf]
  %v76 = vld [vmem:[%s1 + $0xc] sm:$0xf]
  %v77 = vld [vmem:[%s1 + $0x10] sm:$0xf]
  %v78 = vld [vmem:[%s1 + $0x14] sm:$0xf]
  %v79 = vld [vmem:[%s1 + $0x18] sm:$0xf]
  %v80 = vld [vmem:[%s1 + $0x1c] sm:$0xf]
  %v81 = vld [vmem:[%s1 + $0x20] sm:$0xf]
  %v82 = vld [vmem:[%s1 + $0x24] sm:$0xf]
  %v83 = vld [vmem:[%s1 + $0x28] sm:$0xf]
  %v84 = vld [vmem:[%s1 + $0x2c] sm:$0xf]
  %v85 = vld [vmem:[%s1 + $0x30] sm:$0xf]
  %v86 = vld [vmem:[%s1 + $0x34] sm:$0xf]
  %v87 = vld [vmem:[%s1 + $0x38] sm:$0xf]
  %v88 = vld [vmem:[%s1 + $0x3c] sm:$0xf]
  %v105 = vunpack.c.l.b16 %v57
  %v106 = vunpack.c.l.b16 %v58
  %v107 = vunpack.c.l.b16 %v59
  %v108 = vunpack.c.l.b16 %v60
  %v109 = vunpack.c.l.b16 %v61
  %v110 = vunpack.c.l.b16 %v62
  %v111 = vunpack.c.l.b16 %v63
  %v112 = vunpack.c.l.b16 %v64
  %v113 = vunpack.c.l.b16 %v65
  %v114 = vunpack.c.l.b16 %v66
  %v115 = vunpack.c.l.b16 %v67
  %v116 = vunpack.c.l.b16 %v68
  %v117 = vunpack.c.l.b16 %v69
  %v118 = vunpack.c.l.b16 %v70
  %v119 = vunpack.c.l.b16 %v71
  %v120 = vunpack.c.l.b16 %v72
  %v121 = vpack.c.b16 %v106, %v105
  %v122 = vpack.c.b16 %v108, %v107
  %v123 = vpack.c.b16 %v110, %v109
  %v124 = vpack.c.b16 %v112, %v111
  %v125 = vpack.c.b16 %v114, %v113
  %v126 = vpack.c.b16 %v116, %v115
  %v127 = vpack.c.b16 %v118, %v117
  %v128 = vpack.c.b16 %v120, %v119
  %v153 = vunpack.c.l.b16 %v73
  %v154 = vunpack.c.l.b16 %v74
  %v155 = vunpack.c.l.b16 %v75
  %v156 = vunpack.c.l.b16 %v76
  %v157 = vunpack.c.l.b16 %v77
  %v158 = vunpack.c.l.b16 %v78
  %v159 = vunpack.c.l.b16 %v79
  %v160 = vunpack.c.l.b16 %v80
  %v161 = vunpack.c.l.b16 %v81
  %v162 = vunpack.c.l.b16 %v82
  %v163 = vunpack.c.l.b16 %v83
  %v164 = vunpack.c.l.b16 %v84
  %v165 = vunpack.c.l.b16 %v85
  %v166 = vunpack.c.l.b16 %v86
  %v167 = vunpack.c.l.b16 %v87
  %v168 = vunpack.c.l.b16 %v88
  %v169 = vpack.c.b16 %v154, %v153
  %v170 = vpack.c.b16 %v156, %v155
  %v171 = vpack.c.b16 %v158, %v157
  %v172 = vpack.c.b16 %v160, %v159
  %v173 = vpack.c.b16 %v162, %v161
  %v174 = vpack.c.b16 %v164, %v163
  %v175 = vpack.c.b16 %v166, %v165
  %v176 = vpack.c.b16 %v168, %v167
  %185 = vmatprep.subr.bf16.mxu0 0
  %186 = vmatpush1.bf16.msra.mxu0 %v169
  %187 = vmatprep.subr.bf16.mxu0 0
  %188 = vmatpush1.bf16.msra.mxu0 %v170
  %189 = vmatprep.subr.bf16.mxu0 0
  %190 = vmatpush1.bf16.msra.mxu0 %v171
  %191 = vmatprep.subr.bf16.mxu0 0
  %192 = vmatpush1.bf16.msra.mxu0 %v172
  %193 = vmatprep.subr.bf16.mxu0 0
  %194 = vmatpush1.bf16.msra.mxu0 %v173
  %195 = vmatprep.subr.bf16.mxu0 0
  %196 = vmatpush1.bf16.msra.mxu0 %v174
  %197 = vmatprep.subr.bf16.mxu0 0
  %198 = vmatpush1.bf16.msra.mxu0 %v175
  %199 = vmatprep.subr.bf16.mxu0 0
  %200 = vmatpush1.bf16.msra.mxu0 %v176
  %201 = vmatprep.subr.bf16.mxu0 0
  %202 = vmatpush1.bf16.msra.mxu0 0
  %203 = vmatprep.subr.bf16.mxu0 0
  %204 = vmatpush1.bf16.msra.mxu0 0
  %205 = vmatprep.subr.bf16.mxu0 0
  %206 = vmatpush1.bf16.msra.mxu0 0
  %207 = vmatprep.subr.bf16.mxu0 0
  %208 = vmatpush1.bf16.msra.mxu0 0
  %209 = vmatprep.subr.bf16.mxu0 0
  %210 = vmatpush1.bf16.msra.mxu0 0
  %211 = vmatprep.subr.bf16.mxu0 0
  %212 = vmatpush1.bf16.msra.mxu0 0
  %213 = vmatprep.subr.bf16.mxu0 0
  %214 = vmatpush1.bf16.msra.mxu0 0
  %215 = vmatprep.subr.bf16.mxu0 0
  %216 = vmatpush1.bf16.msra.mxu0 0
  %217 = vmatprep.mubr.bf16.mxu0 0
  %218 = vmatmul.mubr.bf16.gmra.mrb[0].mxu0 %v121
  %v219 = vpop.f32.mrb[0].mxu0
  %v220 = vadd.f32 0.0, %v219
  %v221 = vpop.f32.mrb[0].mxu0
  %v222 = vpop.f32.mrb[0].mxu0
  %v223 = vadd.f32 0.0, %v222
  %v224 = vpop.f32.mrb[0].mxu0
  %225 = vmatprep.mubr.bf16.mxu0 0
  %226 = vmatmul.mubr.bf16.gmra.mrb[0].mxu0 %v122
  %v227 = vpop.f32.mrb[0].mxu0
  %v228 = vadd.f32 0.0, %v227
  %v229 = vpop.f32.mrb[0].mxu0
  %v230 = vpop.f32.mrb[0].mxu0
  %v231 = vadd.f32 0.0, %v230
  %v232 = vpop.f32.mrb[0].mxu0
  %233 = vmatprep.mubr.bf16.mxu0 0
  %234 = vmatmul.mubr.bf16.gmra.mrb[0].mxu0 %v123
  %v235 = vpop.f32.mrb[0].mxu0
  %v236 = vadd.f32 0.0, %v235
  %v237 = vpop.f32.mrb[0].mxu0
  %v238 = vpop.f32.mrb[0].mxu0
  %v239 = vadd.f32 0.0, %v238
  %v240 = vpop.f32.mrb[0].mxu0
  %241 = vmatprep.mubr.bf16.mxu0 0
  %242 = vmatmul.mubr.bf16.gmra.mrb[0].mxu0 %v124
  %v243 = vpop.f32.mrb[0].mxu0
  %v244 = vadd.f32 0.0, %v243
  %v245 = vpop.f32.mrb[0].mxu0
  %v246 = vpop.f32.mrb[0].mxu0
  %v247 = vadd.f32 0.0, %v246
  %v248 = vpop.f32.mrb[0].mxu0
  %249 = vmatprep.mubr.bf16.mxu0 0
  %250 = vmatmul.mubr.bf16.gmra.mrb[0].mxu0 %v125
  %v251 = vpop.f32.mrb[0].mxu0
  %v252 = vadd.f32 0.0, %v251
  %v253 = vpop.f32.mrb[0].mxu0
  %v254 = vpop.f32.mrb[0].mxu0
  %v255 = vadd.f32 0.0, %v254
  %v256 = vpop.f32.mrb[0].mxu0
  %257 = vmatprep.mubr.bf16.mxu0 0
  %258 = vmatmul.mubr.bf16.gmra.mrb[0].mxu0 %v126
  %v259 = vpop.f32.mrb[0].mxu0
  %v260 = vadd.f32 0.0, %v259
  %v261 = vpop.f32.mrb[0].mxu0
  %v262 = vpop.f32.mrb[0].mxu0
  %v263 = vadd.f32 0.0, %v262
  %v264 = vpop.f32.mrb[0].mxu0
  %265 = vmatprep.mubr.bf16.mxu0 0
  %266 = vmatmul.mubr.bf16.gmra.mrb[0].mxu0 %v127
  %v267 = vpop.f32.mrb[0].mxu0
  %v268 = vadd.f32 0.0, %v267
  %v269 = vpop.f32.mrb[0].mxu0
  %v270 = vpop.f32.mrb[0].mxu0
  %v271 = vadd.f32 0.0, %v270
  %v272 = vpop.f32.mrb[0].mxu0
  %273 = vmatprep.mubr.bf16.mxu0 0
  %274 = vmatmul.mubr.bf16.gmra.mrb[0].mxu0 %v128
  %v275 = vpop.f32.mrb[0].mxu0
  %v276 = vadd.f32 0.0, %v275
  %v277 = vpop.f32.mrb[0].mxu0
  %v278 = vpop.f32.mrb[0].mxu0
  %v279 = vadd.f32 0.0, %v278
  %v280 = vpop.f32.mrb[0].mxu0
  %281 = vdwg.mxu0
  %v282 = vadd.f32 %v41, %v220
  %v283 = vadd.f32 %v42, %v223
  %v284 = vadd.f32 %v43, %v228
  %v285 = vadd.f32 %v44, %v231
  %v286 = vadd.f32 %v45, %v236
  %v287 = vadd.f32 %v46, %v239
  %v288 = vadd.f32 %v47, %v244
  %v289 = vadd.f32 %v48, %v247
  %v290 = vadd.f32 %v49, %v252
  %v291 = vadd.f32 %v50, %v255
  %v292 = vadd.f32 %v51, %v260
  %v293 = vadd.f32 %v52, %v263
  %v294 = vadd.f32 %v53, %v268
  %v295 = vadd.f32 %v54, %v271
  %v296 = vadd.f32 %v55, %v276
  %v297 = vadd.f32 %v56, %v279
  %298 = vst [vmem:[#allocation2] sm:$0xff] %v282
  %299 = vst [vmem:[#allocation2 + $0x8] sm:$0xff] %v283
  %300 = vst [vmem:[#allocation2 + $0x10] sm:$0xff] %v284
  %301 = vst [vmem:[#allocation2 + $0x18] sm:$0xff] %v285
  %302 = vst [vmem:[#allocation2 + $0x20] sm:$0xff] %v286
  %303 = vst [vmem:[#allocation2 + $0x28] sm:$0xff] %v287
  %304 = vst [vmem:[#allocation2 + $0x30] sm:$0xff] %v288
  %305 = vst [vmem:[#allocation2 + $0x38] sm:$0xff] %v289
  %306 = vst [vmem:[#allocation2 + $0x40] sm:$0xff] %v290
  %307 = vst [vmem:[#allocation2 + $0x48] sm:$0xff] %v291
  %308 = vst [vmem:[#allocation2 + $0x50] sm:$0xff] %v292
  %309 = vst [vmem:[#allocation2 + $0x58] sm:$0xff] %v293
  %310 = vst [vmem:[#allocation2 + $0x60] sm:$0xff] %v294
  %311 = vst [vmem:[#allocation2 + $0x68] sm:$0xff] %v295
  %312 = vst [vmem:[#allocation2 + $0x70] sm:$0xff] %v296
  %313 = vst [vmem:[#allocation2 + $0x78] sm:$0xff] %v297
  // Predicated region
  $region26: #{basic_block_forward.2} parent=0 // pred_check
    %p314 = pneg %p21
  $region27: #{basic_block_forward.2} parent=0 // pred_check_branch
    %316 = sbr.rel (%p314) target = $region29
  $region28: #{basic_block_forward.2} parent=0 // pred_region
    %v317 = vld [vmem:[#allocation2] sm:$0xff]
    %v318 = vld [vmem:[#allocation2 + $0x8] sm:$0xff]
    %v319 = vld [vmem:[#allocation2 + $0x10] sm:$0xff]
    %v320 = vld [vmem:[#allocation2 + $0x18] sm:$0xff]
    %v321 = vld [vmem:[#allocation2 + $0x20] sm:$0xff]
    %v322 = vld [vmem:[#allocation2 + $0x28] sm:$0xff]
    %v323 = vld [vmem:[#allocation2 + $0x30] sm:$0xff]
    %v324 = vld [vmem:[#allocation2 + $0x38] sm:$0xff]
    %v325 = vld [vmem:[#allocation2 + $0x40] sm:$0xff]
    %v326 = vld [vmem:[#allocation2 + $0x48] sm:$0xff]
    %v327 = vld [vmem:[#allocation2 + $0x50] sm:$0xff]
    %v328 = vld [vmem:[#allocation2 + $0x58] sm:$0xff]
    %v329 = vld [vmem:[#allocation2 + $0x60] sm:$0xff]
    %v330 = vld [vmem:[#allocation2 + $0x68] sm:$0xff]
    %v331 = vld [vmem:[#allocation2 + $0x70] sm:$0xff]
    %v332 = vld [vmem:[#allocation2 + $0x78] sm:$0xff]
    %v333 = vld [vmem:[%s2] sm:$0x1]
    %v335 = vlaneseq
    %v336 = vshrl.u32 %v335, 7
    %v337 = vsub.s32 0, %v336
    %v338 = vrot.slane %v333, %v337
    %v340 = vmul.f32 %v317, %v338
    %v341 = vmul.f32 %v318, %v338
    %v342 = vmul.f32 %v319, %v338
    %v343 = vmul.f32 %v320, %v338
    %v344 = vmul.f32 %v321, %v338
    %v345 = vmul.f32 %v322, %v338
    %v346 = vmul.f32 %v323, %v338
    %v347 = vmul.f32 %v324, %v338
    %v348 = vmul.f32 %v325, %v338
    %v349 = vmul.f32 %v326, %v338
    %v350 = vmul.f32 %v327, %v338
    %v351 = vmul.f32 %v328, %v338
    %v352 = vmul.f32 %v329, %v338
    %v353 = vmul.f32 %v330, %v338
    %v354 = vmul.f32 %v331, %v338
    %v355 = vmul.f32 %v332, %v338
    %v356 = vld [vmem:[%s3] sm:$0x1]
    %v358 = vlaneseq
    %v359 = vshrl.u32 %v358, 7
    %v360 = vsub.s32 0, %v359
    %v361 = vrot.slane %v356, %v360
    %v363 = vadd.f32 %v340, %v361
    %v364 = vadd.f32 %v341, %v361
    %v365 = vadd.f32 %v342, %v361
    %v366 = vadd.f32 %v343, %v361
    %v367 = vadd.f32 %v344, %v361
    %v368 = vadd.f32 %v345, %v361
    %v369 = vadd.f32 %v346, %v361
    %v370 = vadd.f32 %v347, %v361
    %v371 = vadd.f32 %v348, %v361
    %v372 = vadd.f32 %v349, %v361
    %v373 = vadd.f32 %v350, %v361
    %v374 = vadd.f32 %v351, %v361
    %v375 = vadd.f32 %v352, %v361
    %v376 = vadd.f32 %v353, %v361
    %v377 = vadd.f32 %v354, %v361
    %v378 = vadd.f32 %v355, %v361
    %v379 = vld [vmem:[%s4] sm:$0x1]
    %v380 = vmax.f32 %v363, 0.0
    %v381 = vmax.f32 %v364, 0.0
    %v382 = vmax.f32 %v365, 0.0
    %v383 = vmax.f32 %v366, 0.0
    %v384 = vmax.f32 %v367, 0.0
    %v385 = vmax.f32 %v368, 0.0
    %v386 = vmax.f32 %v369, 0.0
    %v387 = vmax.f32 %v370, 0.0
    %v388 = vmax.f32 %v371, 0.0
    %v389 = vmax.f32 %v372, 0.0
    %v390 = vmax.f32 %v373, 0.0
    %v391 = vmax.f32 %v374, 0.0
    %v392 = vmax.f32 %v375, 0.0
    %v393 = vmax.f32 %v376, 0.0
    %v394 = vmax.f32 %v377, 0.0
    %v395 = vmax.f32 %v378, 0.0
    %v397 = vlaneseq
    %v398 = vshrl.u32 %v397, 7
    %v399 = vsub.s32 0, %v398
    %v400 = vrot.slane %v379, %v399
    %v402 = vmul.f32 %v400, %v380
    %v403 = vmul.f32 %v400, %v381
    %v404 = vmul.f32 %v400, %v382
    %v405 = vmul.f32 %v400, %v383
    %v406 = vmul.f32 %v400, %v384
    %v407 = vmul.f32 %v400, %v385
    %v408 = vmul.f32 %v400, %v386
    %v409 = vmul.f32 %v400, %v387
    %v410 = vmul.f32 %v400, %v388
    %v411 = vmul.f32 %v400, %v389
    %v412 = vmul.f32 %v400, %v390
    %v413 = vmul.f32 %v400, %v391
    %v414 = vmul.f32 %v400, %v392
    %v415 = vmul.f32 %v400, %v393
    %v416 = vmul.f32 %v400, %v394
    %v417 = vmul.f32 %v400, %v395
    %v418 = vsub.f32 1.0, %v379
    %v420 = vlaneseq
    %v421 = vshrl.u32 %v420, 7
    %v422 = vsub.s32 0, %v421
    %v423 = vrot.slane %v418, %v422
    %v425 = vmul.f32 %v423, %v363
    %v426 = vmul.f32 %v423, %v364
    %v427 = vmul.f32 %v423, %v365
    %v428 = vmul.f32 %v423, %v366
    %v429 = vmul.f32 %v423, %v367
    %v430 = vmul.f32 %v423, %v368
    %v431 = vmul.f32 %v423, %v369
    %v432 = vmul.f32 %v423, %v370
    %v433 = vmul.f32 %v423, %v371
    %v434 = vmul.f32 %v423, %v372
    %v435 = vmul.f32 %v423, %v373
    %v436 = vmul.f32 %v423, %v374
    %v437 = vmul.f32 %v423, %v375
    %v438 = vmul.f32 %v423, %v376
    %v439 = vmul.f32 %v423, %v377
    %v440 = vmul.f32 %v423, %v378
    %v441 = vadd.f32 %v402, %v425
    %v442 = vadd.f32 %v403, %v426
    %v443 = vadd.f32 %v404, %v427
    %v444 = vadd.f32 %v405, %v428
    %v445 = vadd.f32 %v406, %v429
    %v446 = vadd.f32 %v407, %v430
    %v447 = vadd.f32 %v408, %v431
    %v448 = vadd.f32 %v409, %v432
    %v449 = vadd.f32 %v410, %v433
    %v450 = vadd.f32 %v411, %v434
    %v451 = vadd.f32 %v412, %v435
    %v452 = vadd.f32 %v413, %v436
    %v453 = vadd.f32 %v414, %v437
    %v454 = vadd.f32 %v415, %v438
    %v455 = vadd.f32 %v416, %v439
    %v456 = vadd.f32 %v417, %v440
    %457 = vst [vmem:[%s5] sm:$0xff] %v441
    %458 = vst [vmem:[%s5 + $0x8] sm:$0xff] %v442
    %459 = vst [vmem:[%s5 + $0x10] sm:$0xff] %v443
    %460 = vst [vmem:[%s5 + $0x18] sm:$0xff] %v444
    %461 = vst [vmem:[%s5 + $0x20] sm:$0xff] %v445
    %462 = vst [vmem:[%s5 + $0x28] sm:$0xff] %v446
    %463 = vst [vmem:[%s5 + $0x30] sm:$0xff] %v447
    %464 = vst [vmem:[%s5 + $0x38] sm:$0xff] %v448
    %465 = vst [vmem:[%s5 + $0x40] sm:$0xff] %v449
    %466 = vst [vmem:[%s5 + $0x48] sm:$0xff] %v450
    %467 = vst [vmem:[%s5 + $0x50] sm:$0xff] %v451
    %468 = vst [vmem:[%s5 + $0x58] sm:$0xff] %v452
    %469 = vst [vmem:[%s5 + $0x60] sm:$0xff] %v453
    %470 = vst [vmem:[%s5 + $0x68] sm:$0xff] %v454
    %471 = vst [vmem:[%s5 + $0x70] sm:$0xff] %v455
    %472 = vst [vmem:[%s5 + $0x78] sm:$0xff] %v456
  $region29: #{basic_block_forward.2} parent=0 // pred_fallthru
    _
  // Predicated region
  $region30: #{basic_block_forward.2} parent=0 // pred_check
    _
  $region31: #{basic_block_forward.2} parent=0 // pred_check_branch
    %474 = sbr.rel (0) target = $region33
  $region32: #{basic_block_forward.2} parent=0 // pred_region
    _
  $region33: #{basic_block_forward.2} parent=0 // pred_fallthru
    _
  // Predicated region
  $region34: #{basic_block_forward.2} parent=0 // pred_check
    _
  $region35: #{basic_block_forward.2} parent=0 // pred_check_branch
    %476 = sbr.rel (0) target = $region37
  $region36: #{basic_block_forward.2} parent=0 // pred_region
    _
  $region37: #{basic_block_forward.2} parent=0 // pred_fallthru
    _

// kernel: basic_block_forward.3
$region0: #{basic_block_forward.3}
  #allocation0 [shape = 'u32[]', space=smem, size = 0x4, offset = 0x4, fixed_abs, tag = 'smem constant byte address 0x4 - core index']
  #allocation1 [shape = 'u32[144,128]{1,0:T(1,128)}', space=vmem, size = 0x12000, scoped, tag = 'internal scratch']
  #allocation2 [shape = 'f32[128,128]{1,0:T(8,128)}', space=vmem, size = 0x10000, scoped, tag = 'scratch operand']
  %s0 = inlined_call_operand.vmem [shape: bf16[128,128], index: 0, kind: input, shape index: {}]
  %s1 = inlined_call_operand.vmem [shape: bf16[128,128], index: 1, kind: input, shape index: {}]
  %s2 = inlined_call_operand.vmem [shape: f32[128,128], index: 2, kind: input, shape index: {}]
  %s3 = inlined_call_operand.vmem [shape: f32[128,128], index: 3, kind: output, shape index: {}]
  %s4 = sld [smem:[#allocation0]]
  $region30: #{basic_block_forward.3} parent=0
    _
  %s6 = ssub.s32 1, %s4
  %s7 = scalar_select 0, %s6, %s4
  // Predicated region
  $region2: #{basic_block_forward.3} parent=0 // pred_check
    _
  $region3: #{basic_block_forward.3} parent=0 // pred_check_branch
    %9 = sbr.rel (0) target = $region5
  $region4: #{basic_block_forward.3} parent=0 // pred_region
    _
  $region5: #{basic_block_forward.3} parent=0 // pred_fallthru
    _
  // Predicated region
  $region6: #{basic_block_forward.3} parent=0 // pred_check
    _
  $region7: #{basic_block_forward.3} parent=0 // pred_check_branch
    %11 = sbr.rel (0) target = $region9
  $region8: #{basic_block_forward.3} parent=0 // pred_region
    _
  $region9: #{basic_block_forward.3} parent=0 // pred_fallthru
    _
  // Predicated region
  $region10: #{basic_block_forward.3} parent=0 // pred_check
    _
  $region11: #{basic_block_forward.3} parent=0 // pred_check_branch
    %13 = sbr.rel (0) target = $region13
  $region12: #{basic_block_forward.3} parent=0 // pred_region
    _
  $region13: #{basic_block_forward.3} parent=0 // pred_fallthru
    _
  %p15 = scmp.eq.s32.totalorder 0, 0
  // Predicated region
  $region14: #{basic_block_forward.3} parent=0 // pred_check
    %p16 = pneg %p15
  $region15: #{basic_block_forward.3} parent=0 // pred_check_branch
    %18 = sbr.rel (%p16) target = $region17
  $region16: #{basic_block_forward.3} parent=0 // pred_region
    %19 = vst [vmem:[#allocation2] sm:$0xff] 0.0
    %20 = vst [vmem:[#allocation2 + $0x8] sm:$0xff] 0.0
    %21 = vst [vmem:[#allocation2 + $0x10] sm:$0xff] 0.0
    %22 = vst [vmem:[#allocation2 + $0x18] sm:$0xff] 0.0
    %23 = vst [vmem:[#allocation2 + $0x20] sm:$0xff] 0.0
    %24 = vst [vmem:[#allocation2 + $0x28] sm:$0xff] 0.0
    %25 = vst [vmem:[#allocation2 + $0x30] sm:$0xff] 0.0
    %26 = vst [vmem:[#allocation2 + $0x38] sm:$0xff] 0.0
    %27 = vst [vmem:[#allocation2 + $0x40] sm:$0xff] 0.0
    %28 = vst [vmem:[#allocation2 + $0x48] sm:$0xff] 0.0
    %29 = vst [vmem:[#allocation2 + $0x50] sm:$0xff] 0.0
    %30 = vst [vmem:[#allocation2 + $0x58] sm:$0xff] 0.0
    %31 = vst [vmem:[#allocation2 + $0x60] sm:$0xff] 0.0
    %32 = vst [vmem:[#allocation2 + $0x68] sm:$0xff] 0.0
    %33 = vst [vmem:[#allocation2 + $0x70] sm:$0xff] 0.0
    %34 = vst [vmem:[#allocation2 + $0x78] sm:$0xff] 0.0
  $region17: #{basic_block_forward.3} parent=0 // pred_fallthru
    _
  %v35 = vld [vmem:[#allocation2] sm:$0xff]
  %v36 = vld [vmem:[#allocation2 + $0x8] sm:$0xff]
  %v37 = vld [vmem:[#allocation2 + $0x10] sm:$0xff]
  %v38 = vld [vmem:[#allocation2 + $0x18] sm:$0xff]
  %v39 = vld [vmem:[#allocation2 + $0x20] sm:$0xff]
  %v40 = vld [vmem:[#allocation2 + $0x28] sm:$0xff]
  %v41 = vld [vmem:[#allocation2 + $0x30] sm:$0xff]
  %v42 = vld [vmem:[#allocation2 + $0x38] sm:$0xff]
  %v43 = vld [vmem:[#allocation2 + $0x40] sm:$0xff]
  %v44 = vld [vmem:[#allocation2 + $0x48] sm:$0xff]
  %v45 = vld [vmem:[#allocation2 + $0x50] sm:$0xff]
  %v46 = vld [vmem:[#allocation2 + $0x58] sm:$0xff]
  %v47 = vld [vmem:[#allocation2 + $0x60] sm:$0xff]
  %v48 = vld [vmem:[#allocation2 + $0x68] sm:$0xff]
  %v49 = vld [vmem:[#allocation2 + $0x70] sm:$0xff]
  %v50 = vld [vmem:[#allocation2 + $0x78] sm:$0xff]
  %v51 = vld [vmem:[%s0] sm:$0xf]
  %v52 = vld [vmem:[%s0 + $0x4] sm:$0xf]
  %v53 = vld [vmem:[%s0 + $0x8] sm:$0xf]
  %v54 = vld [vmem:[%s0 + $0xc] sm:$0xf]
  %v55 = vld [vmem:[%s0 + $0x10] sm:$0xf]
  %v56 = vld [vmem:[%s0 + $0x14] sm:$0xf]
  %v57 = vld [vmem:[%s0 + $0x18] sm:$0xf]
  %v58 = vld [vmem:[%s0 + $0x1c] sm:$0xf]
  %v59 = vld [vmem:[%s0 + $0x20] sm:$0xf]
  %v60 = vld [vmem:[%s0 + $0x24] sm:$0xf]
  %v61 = vld [vmem:[%s0 + $0x28] sm:$0xf]
  %v62 = vld [vmem:[%s0 + $0x2c] sm:$0xf]
  %v63 = vld [vmem:[%s0 + $0x30] sm:$0xf]
  %v64 = vld [vmem:[%s0 + $0x34] sm:$0xf]
  %v65 = vld [vmem:[%s0 + $0x38] sm:$0xf]
  %v66 = vld [vmem:[%s0 + $0x3c] sm:$0xf]
  %v67 = vld [vmem:[%s1] sm:$0xf]
  %v68 = vld [vmem:[%s1 + $0x4] sm:$0xf]
  %v69 = vld [vmem:[%s1 + $0x8] sm:$0xf]
  %v70 = vld [vmem:[%s1 + $0xc] sm:$0xf]
  %v71 = vld [vmem:[%s1 + $0x10] sm:$0xf]
  %v72 = vld [vmem:[%s1 + $0x14] sm:$0xf]
  %v73 = vld [vmem:[%s1 + $0x18] sm:$0xf]
  %v74 = vld [vmem:[%s1 + $0x1c] sm:$0xf]
  %v75 = vld [vmem:[%s1 + $0x20] sm:$0xf]
  %v76 = vld [vmem:[%s1 + $0x24] sm:$0xf]
  %v77 = vld [vmem:[%s1 + $0x28] sm:$0xf]
  %v78 = vld [vmem:[%s1 + $0x2c] sm:$0xf]
  %v79 = vld [vmem:[%s1 + $0x30] sm:$0xf]
  %v80 = vld [vmem:[%s1 + $0x34] sm:$0xf]
  %v81 = vld [vmem:[%s1 + $0x38] sm:$0xf]
  %v82 = vld [vmem:[%s1 + $0x3c] sm:$0xf]
  %v99 = vunpack.c.l.b16 %v51
  %v100 = vunpack.c.l.b16 %v52
  %v101 = vunpack.c.l.b16 %v53
  %v102 = vunpack.c.l.b16 %v54
  %v103 = vunpack.c.l.b16 %v55
  %v104 = vunpack.c.l.b16 %v56
  %v105 = vunpack.c.l.b16 %v57
  %v106 = vunpack.c.l.b16 %v58
  %v107 = vunpack.c.l.b16 %v59
  %v108 = vunpack.c.l.b16 %v60
  %v109 = vunpack.c.l.b16 %v61
  %v110 = vunpack.c.l.b16 %v62
  %v111 = vunpack.c.l.b16 %v63
  %v112 = vunpack.c.l.b16 %v64
  %v113 = vunpack.c.l.b16 %v65
  %v114 = vunpack.c.l.b16 %v66
  %v115 = vpack.c.b16 %v100, %v99
  %v116 = vpack.c.b16 %v102, %v101
  %v117 = vpack.c.b16 %v104, %v103
  %v118 = vpack.c.b16 %v106, %v105
  %v119 = vpack.c.b16 %v108, %v107
  %v120 = vpack.c.b16 %v110, %v109
  %v121 = vpack.c.b16 %v112, %v111
  %v122 = vpack.c.b16 %v114, %v113
  %v147 = vunpack.c.l.b16 %v67
  %v148 = vunpack.c.l.b16 %v68
  %v149 = vunpack.c.l.b16 %v69
  %v150 = vunpack.c.l.b16 %v70
  %v151 = vunpack.c.l.b16 %v71
  %v152 = vunpack.c.l.b16 %v72
  %v153 = vunpack.c.l.b16 %v73
  %v154 = vunpack.c.l.b16 %v74
  %v155 = vunpack.c.l.b16 %v75
  %v156 = vunpack.c.l.b16 %v76
  %v157 = vunpack.c.l.b16 %v77
  %v158 = vunpack.c.l.b16 %v78
  %v159 = vunpack.c.l.b16 %v79
  %v160 = vunpack.c.l.b16 %v80
  %v161 = vunpack.c.l.b16 %v81
  %v162 = vunpack.c.l.b16 %v82
  %v163 = vpack.c.b16 %v148, %v147
  %v164 = vpack.c.b16 %v150, %v149
  %v165 = vpack.c.b16 %v152, %v151
  %v166 = vpack.c.b16 %v154, %v153
  %v167 = vpack.c.b16 %v156, %v155
  %v168 = vpack.c.b16 %v158, %v157
  %v169 = vpack.c.b16 %v160, %v159
  %v170 = vpack.c.b16 %v162, %v161
  %179 = vmatprep.subr.bf16.mxu0 0
  %180 = vmatpush1.bf16.msra.mxu0 %v163
  %181 = vmatprep.subr.bf16.mxu0 0
  %182 = vmatpush1.bf16.msra.mxu0 %v164
  %183 = vmatprep.subr.bf16.mxu0 0
  %184 = vmatpush1.bf16.msra.mxu0 %v165
  %185 = vmatprep.subr.bf16.mxu0 0
  %186 = vmatpush1.bf16.msra.mxu0 %v166
  %187 = vmatprep.subr.bf16.mxu0 0
  %188 = vmatpush1.bf16.msra.mxu0 %v167
  %189 = vmatprep.subr.bf16.mxu0 0
  %190 = vmatpush1.bf16.msra.mxu0 %v168
  %191 = vmatprep.subr.bf16.mxu0 0
  %192 = vmatpush1.bf16.msra.mxu0 %v169
  %193 = vmatprep.subr.bf16.mxu0 0
  %194 = vmatpush1.bf16.msra.mxu0 %v170
  %195 = vmatprep.subr.bf16.mxu0 0
  %196 = vmatpush1.bf16.msra.mxu0 0
  %197 = vmatprep.subr.bf16.mxu0 0
  %198 = vmatpush1.bf16.msra.mxu0 0
  %199 = vmatprep.subr.bf16.mxu0 0
  %200 = vmatpush1.bf16.msra.mxu0 0
  %201 = vmatprep.subr.bf16.mxu0 0
  %202 = vmatpush1.bf16.msra.mxu0 0
  %203 = vmatprep.subr.bf16.mxu0 0
  %204 = vmatpush1.bf16.msra.mxu0 0
  %205 = vmatprep.subr.bf16.mxu0 0
  %206 = vmatpush1.bf16.msra.mxu0 0
  %207 = vmatprep.subr.bf16.mxu0 0
  %208 = vmatpush1.bf16.msra.mxu0 0
  %209 = vmatprep.subr.bf16.mxu0 0
  %210 = vmatpush1.bf16.msra.mxu0 0
  %211 = vmatprep.mubr.bf16.mxu0 0
  %212 = vmatmul.mubr.bf16.gmra.mrb[0].mxu0 %v115
  %v213 = vpop.f32.mrb[0].mxu0
  %v214 = vadd.f32 0.0, %v213
  %v215 = vpop.f32.mrb[0].mxu0
  %v216 = vpop.f32.mrb[0].mxu0
  %v217 = vadd.f32 0.0, %v216
  %v218 = vpop.f32.mrb[0].mxu0
  %219 = vmatprep.mubr.bf16.mxu0 0
  %220 = vmatmul.mubr.bf16.gmra.mrb[0].mxu0 %v116
  %v221 = vpop.f32.mrb[0].mxu0
  %v222 = vadd.f32 0.0, %v221
  %v223 = vpop.f32.mrb[0].mxu0
  %v224 = vpop.f32.mrb[0].mxu0
  %v225 = vadd.f32 0.0, %v224
  %v226 = vpop.f32.mrb[0].mxu0
  %227 = vmatprep.mubr.bf16.mxu0 0
  %228 = vmatmul.mubr.bf16.gmra.mrb[0].mxu0 %v117
  %v229 = vpop.f32.mrb[0].mxu0
  %v230 = vadd.f32 0.0, %v229
  %v231 = vpop.f32.mrb[0].mxu0
  %v232 = vpop.f32.mrb[0].mxu0
  %v233 = vadd.f32 0.0, %v232
  %v234 = vpop.f32.mrb[0].mxu0
  %235 = vmatprep.mubr.bf16.mxu0 0
  %236 = vmatmul.mubr.bf16.gmra.mrb[0].mxu0 %v118
  %v237 = vpop.f32.mrb[0].mxu0
  %v238 = vadd.f32 0.0, %v237
  %v239 = vpop.f32.mrb[0].mxu0
  %v240 = vpop.f32.mrb[0].mxu0
  %v241 = vadd.f32 0.0, %v240
  %v242 = vpop.f32.mrb[0].mxu0
  %243 = vmatprep.mubr.bf16.mxu0 0
  %244 = vmatmul.mubr.bf16.gmra.mrb[0].mxu0 %v119
  %v245 = vpop.f32.mrb[0].mxu0
  %v246 = vadd.f32 0.0, %v245
  %v247 = vpop.f32.mrb[0].mxu0
  %v248 = vpop.f32.mrb[0].mxu0
  %v249 = vadd.f32 0.0, %v248
  %v250 = vpop.f32.mrb[0].mxu0
  %251 = vmatprep.mubr.bf16.mxu0 0
  %252 = vmatmul.mubr.bf16.gmra.mrb[0].mxu0 %v120
  %v253 = vpop.f32.mrb[0].mxu0
  %v254 = vadd.f32 0.0, %v253
  %v255 = vpop.f32.mrb[0].mxu0
  %v256 = vpop.f32.mrb[0].mxu0
  %v257 = vadd.f32 0.0, %v256
  %v258 = vpop.f32.mrb[0].mxu0
  %259 = vmatprep.mubr.bf16.mxu0 0
  %260 = vmatmul.mubr.bf16.gmra.mrb[0].mxu0 %v121
  %v261 = vpop.f32.mrb[0].mxu0
  %v262 = vadd.f32 0.0, %v261
  %v263 = vpop.f32.mrb[0].mxu0
  %v264 = vpop.f32.mrb[0].mxu0
  %v265 = vadd.f32 0.0, %v264
  %v266 = vpop.f32.mrb[0].mxu0
  %267 = vmatprep.mubr.bf16.mxu0 0
  %268 = vmatmul.mubr.bf16.gmra.mrb[0].mxu0 %v122
  %v269 = vpop.f32.mrb[0].mxu0
  %v270 = vadd.f32 0.0, %v269
  %v271 = vpop.f32.mrb[0].mxu0
  %v272 = vpop.f32.mrb[0].mxu0
  %v273 = vadd.f32 0.0, %v272
  %v274 = vpop.f32.mrb[0].mxu0
  %275 = vdwg.mxu0
  %v276 = vadd.f32 %v35, %v214
  %v277 = vadd.f32 %v36, %v217
  %v278 = vadd.f32 %v37, %v222
  %v279 = vadd.f32 %v38, %v225
  %v280 = vadd.f32 %v39, %v230
  %v281 = vadd.f32 %v40, %v233
  %v282 = vadd.f32 %v41, %v238
  %v283 = vadd.f32 %v42, %v241
  %v284 = vadd.f32 %v43, %v246
  %v285 = vadd.f32 %v44, %v249
  %v286 = vadd.f32 %v45, %v254
  %v287 = vadd.f32 %v46, %v257
  %v288 = vadd.f32 %v47, %v262
  %v289 = vadd.f32 %v48, %v265
  %v290 = vadd.f32 %v49, %v270
  %v291 = vadd.f32 %v50, %v273
  %292 = vst [vmem:[#allocation2] sm:$0xff] %v276
  %293 = vst [vmem:[#allocation2 + $0x8] sm:$0xff] %v277
  %294 = vst [vmem:[#allocation2 + $0x10] sm:$0xff] %v278
  %295 = vst [vmem:[#allocation2 + $0x18] sm:$0xff] %v279
  %296 = vst [vmem:[#allocation2 + $0x20] sm:$0xff] %v280
  %297 = vst [vmem:[#allocation2 + $0x28] sm:$0xff] %v281
  %298 = vst [vmem:[#allocation2 + $0x30] sm:$0xff] %v282
  %299 = vst [vmem:[#allocation2 + $0x38] sm:$0xff] %v283
  %300 = vst [vmem:[#allocation2 + $0x40] sm:$0xff] %v284
  %301 = vst [vmem:[#allocation2 + $0x48] sm:$0xff] %v285
  %302 = vst [vmem:[#allocation2 + $0x50] sm:$0xff] %v286
  %303 = vst [vmem:[#allocation2 + $0x58] sm:$0xff] %v287
  %304 = vst [vmem:[#allocation2 + $0x60] sm:$0xff] %v288
  %305 = vst [vmem:[#allocation2 + $0x68] sm:$0xff] %v289
  %306 = vst [vmem:[#allocation2 + $0x70] sm:$0xff] %v290
  %307 = vst [vmem:[#allocation2 + $0x78] sm:$0xff] %v291
  // Predicated region
  $region18: #{basic_block_forward.3} parent=0 // pred_check
    %p308 = pneg %p15
  $region19: #{basic_block_forward.3} parent=0 // pred_check_branch
    %310 = sbr.rel (%p308) target = $region21
  $region20: #{basic_block_forward.3} parent=0 // pred_region
    %v311 = vld [vmem:[#allocation2] sm:$0xff]
    %v312 = vld [vmem:[#allocation2 + $0x8] sm:$0xff]
    %v313 = vld [vmem:[#allocation2 + $0x10] sm:$0xff]
    %v314 = vld [vmem:[#allocation2 + $0x18] sm:$0xff]
    %v315 = vld [vmem:[#allocation2 + $0x20] sm:$0xff]
    %v316 = vld [vmem:[#allocation2 + $0x28] sm:$0xff]
    %v317 = vld [vmem:[#allocation2 + $0x30] sm:$0xff]
    %v318 = vld [vmem:[#allocation2 + $0x38] sm:$0xff]
    %v319 = vld [vmem:[#allocation2 + $0x40] sm:$0xff]
    %v320 = vld [vmem:[#allocation2 + $0x48] sm:$0xff]
    %v321 = vld [vmem:[#allocation2 + $0x50] sm:$0xff]
    %v322 = vld [vmem:[#allocation2 + $0x58] sm:$0xff]
    %v323 = vld [vmem:[#allocation2 + $0x60] sm:$0xff]
    %v324 = vld [vmem:[#allocation2 + $0x68] sm:$0xff]
    %v325 = vld [vmem:[#allocation2 + $0x70] sm:$0xff]
    %v326 = vld [vmem:[#allocation2 + $0x78] sm:$0xff]
    %v327 = vld [vmem:[%s2] sm:$0xff]
    %v328 = vld [vmem:[%s2 + $0x8] sm:$0xff]
    %v329 = vld [vmem:[%s2 + $0x10] sm:$0xff]
    %v330 = vld [vmem:[%s2 + $0x18] sm:$0xff]
    %v331 = vld [vmem:[%s2 + $0x20] sm:$0xff]
    %v332 = vld [vmem:[%s2 + $0x28] sm:$0xff]
    %v333 = vld [vmem:[%s2 + $0x30] sm:$0xff]
    %v334 = vld [vmem:[%s2 + $0x38] sm:$0xff]
    %v335 = vld [vmem:[%s2 + $0x40] sm:$0xff]
    %v336 = vld [vmem:[%s2 + $0x48] sm:$0xff]
    %v337 = vld [vmem:[%s2 + $0x50] sm:$0xff]
    %v338 = vld [vmem:[%s2 + $0x58] sm:$0xff]
    %v339 = vld [vmem:[%s2 + $0x60] sm:$0xff]
    %v340 = vld [vmem:[%s2 + $0x68] sm:$0xff]
    %v341 = vld [vmem:[%s2 + $0x70] sm:$0xff]
    %v342 = vld [vmem:[%s2 + $0x78] sm:$0xff]
    %v343 = vadd.f32 %v311, %v327
    %v344 = vadd.f32 %v312, %v328
    %v345 = vadd.f32 %v313, %v329
    %v346 = vadd.f32 %v314, %v330
    %v347 = vadd.f32 %v315, %v331
    %v348 = vadd.f32 %v316, %v332
    %v349 = vadd.f32 %v317, %v333
    %v350 = vadd.f32 %v318, %v334
    %v351 = vadd.f32 %v319, %v335
    %v352 = vadd.f32 %v320, %v336
    %v353 = vadd.f32 %v321, %v337
    %v354 = vadd.f32 %v322, %v338
    %v355 = vadd.f32 %v323, %v339
    %v356 = vadd.f32 %v324, %v340
    %v357 = vadd.f32 %v325, %v341
    %v358 = vadd.f32 %v326, %v342
    %359 = vst [vmem:[%s3] sm:$0xff] %v343
    %360 = vst [vmem:[%s3 + $0x8] sm:$0xff] %v344
    %361 = vst [vmem:[%s3 + $0x10] sm:$0xff] %v345
    %362 = vst [vmem:[%s3 + $0x18] sm:$0xff] %v346
    %363 = vst [vmem:[%s3 + $0x20] sm:$0xff] %v347
    %364 = vst [vmem:[%s3 + $0x28] sm:$0xff] %v348
    %365 = vst [vmem:[%s3 + $0x30] sm:$0xff] %v349
    %366 = vst [vmem:[%s3 + $0x38] sm:$0xff] %v350
    %367 = vst [vmem:[%s3 + $0x40] sm:$0xff] %v351
    %368 = vst [vmem:[%s3 + $0x48] sm:$0xff] %v352
    %369 = vst [vmem:[%s3 + $0x50] sm:$0xff] %v353
    %370 = vst [vmem:[%s3 + $0x58] sm:$0xff] %v354
    %371 = vst [vmem:[%s3 + $0x60] sm:$0xff] %v355
    %372 = vst [vmem:[%s3 + $0x68] sm:$0xff] %v356
    %373 = vst [vmem:[%s3 + $0x70] sm:$0xff] %v357
    %374 = vst [vmem:[%s3 + $0x78] sm:$0xff] %v358
  $region21: #{basic_block_forward.3} parent=0 // pred_fallthru
    _
  // Predicated region
  $region22: #{basic_block_forward.3} parent=0 // pred_check
    _
  $region23: #{basic_block_forward.3} parent=0 // pred_check_branch
    %376 = sbr.rel (0) target = $region25
  $region24: #{basic_block_forward.3} parent=0 // pred_region
    _
  $region25: #{basic_block_forward.3} parent=0 // pred_fallthru
    _
  // Predicated region
  $region26: #{basic_block_forward.3} parent=0 // pred_check
    _
  $region27: #{basic_block_forward.3} parent=0 // pred_check_branch
    %378 = sbr.rel (0) target = $region29
  $region28: #{basic_block_forward.3} parent=0 // pred_region
    _
  $region29: #{basic_block_forward.3} parent=0 // pred_fallthru
    _

</llo_original>
